<compile_context>
chip_gen: v7x
topology: tpu7x:2x2x1
jax: 0.10.0
libtpu: 0.0.40
codegen_flags: <defaults>
</compile_context>

<pallas_src>
import jax
import jax.numpy as jnp
from jax.experimental import pallas as pl
from jax.experimental.pallas import tpu as pltpu


def _round_up(x, m):
    return (x + m - 1) // m * m


# ----------------------------------------------------------------------------
# Kernel
# ----------------------------------------------------------------------------
def ada_scheduler_kernel(
    x_ref,      # [tile_b, 768]  compute dtype (bf16)
    lat_ref,    # [tile_b, 1]    f32
    wc_ref,     # [768, 128]     bf16   content_encoder weight (no bias)
    w1a_ref,    # [128, 256]     bf16   combined_fc[0] weight, content rows
    v_ref,      # [1, 256]       f32    = Wl @ W1b   (folded latency branch)
    c_ref,      # [1, 256]       f32    = bl @ W1b + b1
    w2_ref,     # [256, 64]      bf16   combined_fc[3] weight
    b2_ref,     # [1, 64]        f32
    wo_ref,     # [64, 11]       bf16   out weight
    bo_ref,     # [1, 11]        f32
    out_ref,    # [tile_b, 11]   f32
):
    cdt = x_ref.dtype

    # content_encoder: Linear(768 -> 128, bias=False); f32 accumulation on MXU.
    content = jnp.dot(x_ref[...], wc_ref[...], preferred_element_type=jnp.float32)

    # combined_fc[0]: Linear(160 -> 256) on concat(content, lat_emb), expressed
    # as content @ W1a + latency * v + c (rank-1 latency branch folded), + ReLU.
    h1 = jnp.dot(content.astype(cdt), w1a_ref[...],
                 preferred_element_type=jnp.float32)
    h1 = h1 + lat_ref[...] * v_ref[...] + c_ref[...]
    h1 = jnp.maximum(h1, 0.0)
    # Dropout(p=0.5): identity (eval mode).

    # combined_fc[3]: Linear(256 -> 64) + ReLU (+ Dropout eval = identity).
    h2 = jnp.dot(h1.astype(cdt), w2_ref[...],
                 preferred_element_type=jnp.float32) + b2_ref[...]
    h2 = jnp.maximum(h2, 0.0)

    # out: Linear(64 -> 11)
    out_ref[...] = (
        jnp.dot(h2.astype(cdt), wo_ref[...], preferred_element_type=jnp.float32)
        + bo_ref[...]
    ).astype(out_ref.dtype)


# ----------------------------------------------------------------------------
# Wrapper
# ----------------------------------------------------------------------------
def ada_scheduler_forward(x, latency, kparams, *, tile_b=None,
                          compute_dtype=jnp.bfloat16):
    """x: [bs, 768], latency: [bs] -> logits [bs, 11] float32.

    `kparams` must come from `prepare_params` (folded + cast weights).
    """
    bs, d_in = x.shape
    n_knobs = kparams["bo"].shape[1]

    if tile_b is None:
        # Multiple of 8 (sublane); cap so double-buffered bf16 x tiles stay
        # small relative to VMEM on every generation (incl. v7x's 64 MiB).
        tile_b = min(1024, _round_up(max(bs, 1), 8))
    bs_p = _round_up(bs, tile_b)
    num_tiles = bs_p // tile_b

    x_c = x.astype(compute_dtype)
    lat2d = latency.reshape(bs, 1).astype(jnp.float32)
    if bs_p != bs:
        x_c = jnp.pad(x_c, ((0, bs_p - bs), (0, 0)))
        lat2d = jnp.pad(lat2d, ((0, bs_p - bs), (0, 0)))

    def const_spec(arr):
        return pl.BlockSpec(arr.shape, lambda i: (0, 0))

    x_pipeline_mode = pl.Buffered(3) if num_tiles >= 3 else None

    in_specs = [
        pl.BlockSpec((tile_b, d_in), lambda i: (i, 0),
                     pipeline_mode=x_pipeline_mode),
        pl.BlockSpec((tile_b, 1), lambda i: (i, 0)),
        const_spec(kparams["wc"]),
        const_spec(kparams["w1a"]),
        const_spec(kparams["v"]),
        const_spec(kparams["c"]),
        const_spec(kparams["w2"]),
        const_spec(kparams["b2"]),
        const_spec(kparams["wo"]),
        const_spec(kparams["bo"]),
    ]
    out_spec = pl.BlockSpec((tile_b, n_knobs), lambda i: (i, 0))

    out = pl.pallas_call(
        ada_scheduler_kernel,
        out_shape=jax.ShapeDtypeStruct((bs_p, n_knobs), jnp.float32),
        grid_spec=pltpu.PrefetchScalarGridSpec(
            num_scalar_prefetch=0,
            grid=(num_tiles,),
            in_specs=in_specs,
            out_specs=out_spec,
        ),
        compiler_params=pltpu.CompilerParams(
            dimension_semantics=("parallel",),
        ),
    )(
        x_c, lat2d,
        kparams["wc"], kparams["w1a"], kparams["v"], kparams["c"],
        kparams["w2"], kparams["b2"], kparams["wo"], kparams["bo"],
    )
    return out[:bs]


# ----------------------------------------------------------------------------
# Parameters
# ----------------------------------------------------------------------------
def init_params(key, content_inp_dim=768, content_dim=128, latency_dim=32,
                hidden1=256, hidden2=64, n_knobs=11):
    """Deterministic synthetic parameters (PyTorch-like uniform init),
    weights stored as [in, out]."""
    ks = jax.random.split(key, 10)

    def lin(kw, kb, fan_in, fan_out, bias=True):
        bound = 1.0 / (fan_in ** 0.5)
        w = jax.random.uniform(kw, (fan_in, fan_out), jnp.float32, -bound, bound)
        b = (jax.random.uniform(kb, (1, fan_out), jnp.float32, -bound, bound)
             if bias else None)
        return w, b

    wc, _ = lin(ks[0], ks[1], content_inp_dim, content_dim, bias=False)
    wl, bl = lin(ks[2], ks[3], 1, latency_dim)
    w1, b1 = lin(ks[4], ks[5], content_dim + latency_dim, hidden1)
    w2, b2 = lin(ks[6], ks[7], hidden1, hidden2)
    wo, bo = lin(ks[8], ks[9], hidden2, n_knobs)

    return {
        "wc": wc, "wl": wl, "bl": bl,
        "w1": w1, "b1": b1,
        "w2": w2, "b2": b2,
        "wo": wo, "bo": bo,
        "content_dim": content_dim,
    }


def prepare_params(raw, compute_dtype=jnp.bfloat16):
    """Fold the rank-1 latency branch and cast matmul weights to bf16."""
    cd = raw["content_dim"]
    w1a = raw["w1"][:cd, :]          # content rows of combined_fc[0] weight
    w1b = raw["w1"][cd:, :]          # latency rows
    v = raw["wl"] @ w1b              # [1, 256]
    c = raw["bl"] @ w1b + raw["b1"]  # [1, 256]
    return {
        "wc": raw["wc"].astype(compute_dtype),
        "w1a": w1a.astype(compute_dtype),
        "v": v.astype(jnp.float32),
        "c": c.astype(jnp.float32),
        "w2": raw["w2"].astype(compute_dtype),
        "b2": raw["b2"].astype(jnp.float32),
        "wo": raw["wo"].astype(compute_dtype),
        "bo": raw["bo"].astype(jnp.float32),
    }


# ----------------------------------------------------------------------------
# References
# ----------------------------------------------------------------------------
def reference_forward_f32(x, latency, raw):
    """Pure-JAX f32 reference of the original module math."""
    content = x.astype(jnp.float32) @ raw["wc"]
    lat_emb = latency.reshape(-1, 1).astype(jnp.float32) @ raw["wl"] + raw["bl"]
    emb = jnp.concatenate([content, lat_emb], axis=1)
    h1 = jnp.maximum(emb @ raw["w1"] + raw["b1"], 0.0)
    h2 = jnp.maximum(h1 @ raw["w2"] + raw["b2"], 0.0)
    return h2 @ raw["wo"] + raw["bo"]


def reference_forward_mirror(x, latency, kp, compute_dtype=jnp.bfloat16):
    """Pure-JAX reference that mirrors the kernel's bf16 casts exactly."""
    xc = x.astype(compute_dtype)
    lat = latency.reshape(-1, 1).astype(jnp.float32)
    content = jnp.dot(xc, kp["wc"], preferred_element_type=jnp.float32)
    h1 = jnp.dot(content.astype(compute_dtype), kp["w1a"],
                 preferred_element_type=jnp.float32) + lat * kp["v"] + kp["c"]
    h1 = jnp.maximum(h1, 0.0)
    h2 = jnp.dot(h1.astype(compute_dtype), kp["w2"],
                 preferred_element_type=jnp.float32) + kp["b2"]
    h2 = jnp.maximum(h2, 0.0)
    return jnp.dot(h2.astype(compute_dtype), kp["wo"],
                   preferred_element_type=jnp.float32) + kp["bo"]


# ----------------------------------------------------------------------------
# Demo / self-test
# ----------------------------------------------------------------------------
if __name__ == "__main__":
    key = jax.random.PRNGKey(0)
    kx, klat, kp = jax.random.split(key, 3)

    bs, content_inp_dim = 4, 768
    x = jax.random.normal(kx, (bs, content_inp_dim), jnp.float32)
    latency = jax.random.uniform(klat, (bs,), jnp.float32, 0.0, 1.0)

    raw = init_params(kp, content_inp_dim=content_inp_dim)
    kparams = prepare_params(raw, compute_dtype=jnp.bfloat16)

    logits = ada_scheduler_forward(x, latency, kparams)
    logits = jax.block_until_ready(logits)
    assert logits.shape == (bs, 11)

    # Strict check against a reference that mirrors the kernel's bf16 casts.
    ref_mirror = reference_forward_mirror(x, latency, kparams)
    assert jnp.allclose(logits, ref_mirror, atol=1e-3, rtol=1e-3)

    # Sanity check against the full-f32 module math (bf16 -> looser tolerance).
    ref_f32 = reference_forward_f32(x, latency, raw)
    assert jnp.allclose(logits, ref_f32, atol=1e-1, rtol=1e-1)

    print("KERNEL_OK")
</pallas_src>

<mosaic_0001>
module attributes {stable_mosaic.version = 11 : i64} {
  func.func @ada_scheduler_kernel(%arg0: i32, %arg1: memref<8x768xbf16, #tpu.memory_space<vmem>>, %arg2: memref<8x1xf32, #tpu.memory_space<vmem>>, %arg3: memref<768x128xbf16, #tpu.memory_space<vmem>>, %arg4: memref<128x256xbf16, #tpu.memory_space<vmem>>, %arg5: memref<1x256xf32, #tpu.memory_space<vmem>>, %arg6: memref<1x256xf32, #tpu.memory_space<vmem>>, %arg7: memref<256x64xbf16, #tpu.memory_space<vmem>>, %arg8: memref<1x64xf32, #tpu.memory_space<vmem>>, %arg9: memref<64x11xbf16, #tpu.memory_space<vmem>>, %arg10: memref<1x11xf32, #tpu.memory_space<vmem>>, %arg11: memref<8x11xf32, #tpu.memory_space<vmem>>) attributes {dimension_semantics = [#tpu.dimension_semantics<parallel>], iteration_bounds = array<i64: 1>, scalar_prefetch = 0 : i64, scratch_operands = 0 : i64, tpu.core_type = #tpu.core_type<tc>, window_params = [{transform_indices = @transform_0, window_bounds = array<i64: 8, 768>}, {transform_indices = @transform_1, window_bounds = array<i64: 8, 1>}, {pipeline_mode = #tpu.pipeline_mode<synchronous>, transform_indices = @transform_2, window_bounds = array<i64: 768, 128>}, {pipeline_mode = #tpu.pipeline_mode<synchronous>, transform_indices = @transform_3, window_bounds = array<i64: 128, 256>}, {pipeline_mode = #tpu.pipeline_mode<synchronous>, transform_indices = @transform_4, window_bounds = array<i64: 1, 256>}, {pipeline_mode = #tpu.pipeline_mode<synchronous>, transform_indices = @transform_5, window_bounds = array<i64: 1, 256>}, {pipeline_mode = #tpu.pipeline_mode<synchronous>, transform_indices = @transform_6, window_bounds = array<i64: 256, 64>}, {pipeline_mode = #tpu.pipeline_mode<synchronous>, transform_indices = @transform_7, window_bounds = array<i64: 1, 64>}, {pipeline_mode = #tpu.pipeline_mode<synchronous>, transform_indices = @transform_8, window_bounds = array<i64: 64, 11>}, {pipeline_mode = #tpu.pipeline_mode<synchronous>, transform_indices = @transform_9, window_bounds = array<i64: 1, 11>}, {transform_indices = @transform_10, window_bounds = array<i64: 8, 11>}]} {
    %c0 = arith.constant 0 : index
    %c0_0 = arith.constant 0 : index
    %0 = vector.load %arg1[%c0, %c0_0] : memref<8x768xbf16, #tpu.memory_space<vmem>>, vector<8x768xbf16>
    %c0_1 = arith.constant 0 : index
    %c0_2 = arith.constant 0 : index
    %1 = vector.load %arg3[%c0_1, %c0_2] : memref<768x128xbf16, #tpu.memory_space<vmem>>, vector<768x128xbf16>
    %cst = arith.constant dense<0.000000e+00> : vector<8x128xf32>
    %2 = tpu.matmul %0, %1, %cst {dimension_numbers = #tpu.dot_dimension_numbers<[1], [0], [0], [1], [0, 0, 1, 1], [], []>} : vector<8x768xbf16>, vector<768x128xbf16>, vector<8x128xf32> -> vector<8x128xf32>
    %3 = arith.truncf %2 : vector<8x128xf32> to vector<8x128xbf16>
    %c0_3 = arith.constant 0 : index
    %c0_4 = arith.constant 0 : index
    %4 = vector.load %arg4[%c0_3, %c0_4] : memref<128x256xbf16, #tpu.memory_space<vmem>>, vector<128x256xbf16>
    %cst_5 = arith.constant dense<0.000000e+00> : vector<8x256xf32>
    %5 = tpu.matmul %3, %4, %cst_5 {dimension_numbers = #tpu.dot_dimension_numbers<[1], [0], [0], [1], [0, 0, 1, 1], [], []>} : vector<8x128xbf16>, vector<128x256xbf16>, vector<8x256xf32> -> vector<8x256xf32>
    %c0_6 = arith.constant 0 : index
    %c0_7 = arith.constant 0 : index
    %6 = vector.load %arg2[%c0_6, %c0_7] : memref<8x1xf32, #tpu.memory_space<vmem>>, vector<8x1xf32>
    %c0_8 = arith.constant 0 : index
    %c0_9 = arith.constant 0 : index
    %7 = vector.load %arg5[%c0_8, %c0_9] : memref<1x256xf32, #tpu.memory_space<vmem>>, vector<1x256xf32>
    %8 = vector.broadcast %6 : vector<8x1xf32> to vector<8x256xf32>
    %9 = vector.broadcast %7 : vector<1x256xf32> to vector<8x256xf32>
    %10 = arith.mulf %8, %9 : vector<8x256xf32>
    %11 = arith.addf %5, %10 : vector<8x256xf32>
    %c0_10 = arith.constant 0 : index
    %c0_11 = arith.constant 0 : index
    %12 = vector.load %arg6[%c0_10, %c0_11] : memref<1x256xf32, #tpu.memory_space<vmem>>, vector<1x256xf32>
    %13 = vector.broadcast %12 : vector<1x256xf32> to vector<8x256xf32>
    %14 = arith.addf %11, %13 : vector<8x256xf32>
    %cst_12 = arith.constant 0.000000e+00 : f32
    %15 = vector.broadcast %cst_12 : f32 to vector<8x256xf32>
    %16 = arith.maximumf %14, %15 : vector<8x256xf32>
    %17 = arith.truncf %16 : vector<8x256xf32> to vector<8x256xbf16>
    %c0_13 = arith.constant 0 : index
    %c0_14 = arith.constant 0 : index
    %18 = vector.load %arg7[%c0_13, %c0_14] : memref<256x64xbf16, #tpu.memory_space<vmem>>, vector<256x64xbf16>
    %cst_15 = arith.constant dense<0.000000e+00> : vector<8x64xf32>
    %19 = tpu.matmul %17, %18, %cst_15 {dimension_numbers = #tpu.dot_dimension_numbers<[1], [0], [0], [1], [0, 0, 1, 1], [], []>} : vector<8x256xbf16>, vector<256x64xbf16>, vector<8x64xf32> -> vector<8x64xf32>
    %c0_16 = arith.constant 0 : index
    %c0_17 = arith.constant 0 : index
    %20 = vector.load %arg8[%c0_16, %c0_17] : memref<1x64xf32, #tpu.memory_space<vmem>>, vector<1x64xf32>
    %21 = vector.broadcast %20 : vector<1x64xf32> to vector<8x64xf32>
    %22 = arith.addf %19, %21 : vector<8x64xf32>
    %cst_18 = arith.constant 0.000000e+00 : f32
    %23 = vector.broadcast %cst_18 : f32 to vector<8x64xf32>
    %24 = arith.maximumf %22, %23 : vector<8x64xf32>
    %25 = arith.truncf %24 : vector<8x64xf32> to vector<8x64xbf16>
    %c0_19 = arith.constant 0 : index
    %c0_20 = arith.constant 0 : index
    %26 = vector.load %arg9[%c0_19, %c0_20] : memref<64x11xbf16, #tpu.memory_space<vmem>>, vector<64x11xbf16>
    %cst_21 = arith.constant dense<0.000000e+00> : vector<8x11xf32>
    %27 = tpu.matmul %25, %26, %cst_21 {dimension_numbers = #tpu.dot_dimension_numbers<[1], [0], [0], [1], [0, 0, 1, 1], [], []>} : vector<8x64xbf16>, vector<64x11xbf16>, vector<8x11xf32> -> vector<8x11xf32>
    %c0_22 = arith.constant 0 : index
    %c0_23 = arith.constant 0 : index
    %28 = vector.load %arg10[%c0_22, %c0_23] : memref<1x11xf32, #tpu.memory_space<vmem>>, vector<1x11xf32>
    %29 = vector.broadcast %28 : vector<1x11xf32> to vector<8x11xf32>
    %30 = arith.addf %27, %29 : vector<8x11xf32>
    %c0_24 = arith.constant 0 : index
    %c0_25 = arith.constant 0 : index
    %31 = vector.load %arg11[%c0_24, %c0_25] : memref<8x11xf32, #tpu.memory_space<vmem>>, vector<8x11xf32>
    tpu.vector_store %arg11[%c0_24, %c0_25], %30 {strides = array<i32>} : memref<8x11xf32, #tpu.memory_space<vmem>>, vector<8x11xf32>,
    return
  }
  func.func @transform_0(%arg0: i32) -> (i32, i32) {
    %c0_i32 = arith.constant 0 : i32
    %c0_i32_0 = arith.constant 0 : i32
    return %arg0, %c0_i32 : i32, i32
  }
  func.func @transform_1(%arg0: i32) -> (i32, i32) {
    %c0_i32 = arith.constant 0 : i32
    %c0_i32_0 = arith.constant 0 : i32
    return %arg0, %c0_i32 : i32, i32
  }
  func.func @transform_2(%arg0: i32) -> (i32, i32) {
    %c0_i32 = arith.constant 0 : i32
    %c0_i32_0 = arith.constant 0 : i32
    %c0_i32_1 = arith.constant 0 : i32
    return %c0_i32, %c0_i32_0 : i32, i32
  }
  func.func @transform_3(%arg0: i32) -> (i32, i32) {
    %c0_i32 = arith.constant 0 : i32
    %c0_i32_0 = arith.constant 0 : i32
    %c0_i32_1 = arith.constant 0 : i32
    return %c0_i32, %c0_i32_0 : i32, i32
  }
  func.func @transform_4(%arg0: i32) -> (i32, i32) {
    %c0_i32 = arith.constant 0 : i32
    %c0_i32_0 = arith.constant 0 : i32
    %c0_i32_1 = arith.constant 0 : i32
    return %c0_i32, %c0_i32_0 : i32, i32
  }
  func.func @transform_5(%arg0: i32) -> (i32, i32) {
    %c0_i32 = arith.constant 0 : i32
    %c0_i32_0 = arith.constant 0 : i32
    %c0_i32_1 = arith.constant 0 : i32
    return %c0_i32, %c0_i32_0 : i32, i32
  }
  func.func @transform_6(%arg0: i32) -> (i32, i32) {
    %c0_i32 = arith.constant 0 : i32
    %c0_i32_0 = arith.constant 0 : i32
    %c0_i32_1 = arith.constant 0 : i32
    return %c0_i32, %c0_i32_0 : i32, i32
  }
  func.func @transform_7(%arg0: i32) -> (i32, i32) {
    %c0_i32 = arith.constant 0 : i32
    %c0_i32_0 = arith.constant 0 : i32
    %c0_i32_1 = arith.constant 0 : i32
    return %c0_i32, %c0_i32_0 : i32, i32
  }
  func.func @transform_8(%arg0: i32) -> (i32, i32) {
    %c0_i32 = arith.constant 0 : i32
    %c0_i32_0 = arith.constant 0 : i32
    %c0_i32_1 = arith.constant 0 : i32
    return %c0_i32, %c0_i32_0 : i32, i32
  }
  func.func @transform_9(%arg0: i32) -> (i32, i32) {
    %c0_i32 = arith.constant 0 : i32
    %c0_i32_0 = arith.constant 0 : i32
    %c0_i32_1 = arith.constant 0 : i32
    return %c0_i32, %c0_i32_0 : i32, i32
  }
  func.func @transform_10(%arg0: i32) -> (i32, i32) {
    %c0_i32 = arith.constant 0 : i32
    %c0_i32_0 = arith.constant 0 : i32
    return %arg0, %c0_i32 : i32, i32
  }
}

</mosaic_0001>

<llo_original>
// kernel: tpu_custom_call.1
$region0: #{tpu_custom_call.1}
  #allocation0 [shape = 'u32[]', space=smem, size = 0x4, offset = 0x4, fixed_abs, tag = 'smem constant byte address 0x4 - core index']
  #allocation1 [shape = 'u32[144,128]{1,0:T(1,128)}', space=vmem, size = 0x12000, scoped, tag = 'internal scratch']
  %s0 = inlined_call_operand.vmem [shape: bf16[8,768], index: 0, kind: input, shape index: {}]
  %s1 = inlined_call_operand.vmem [shape: f32[8,1], index: 1, kind: input, shape index: {}]
  %s2 = inlined_call_operand.hbm [shape: bf16[768,128], index: 2, kind: input, shape index: {}]
  %s3 = inlined_call_operand.vmem [shape: bf16[128,256], index: 3, kind: input, shape index: {}]
  %s4 = inlined_call_operand.vmem [shape: f32[1,256], index: 4, kind: input, shape index: {}]
  %s5 = inlined_call_operand.vmem [shape: f32[1,256], index: 5, kind: input, shape index: {}]
  %s6 = inlined_call_operand.vmem [shape: bf16[256,64], index: 6, kind: input, shape index: {}]
  %s7 = inlined_call_operand.vmem [shape: f32[1,64], index: 7, kind: input, shape index: {}]
  %s8 = inlined_call_operand.vmem [shape: bf16[64,11], index: 8, kind: input, shape index: {}]
  %s9 = inlined_call_operand.vmem [shape: f32[1,11], index: 9, kind: input, shape index: {}]
  %s10 = inlined_call_operand.hbm [shape: f32[8,11], index: 10, kind: output, shape index: {}]
  %s11 = sld [smem:[#allocation0]]
  $region54: #{tpu_custom_call.1} parent=0
    _
  %s13 = ssub.s32 1, %s11
  %s14 = scalar_select 0, %s13, %s11
  $region1: #{tpu_custom_call.1} parent=0
    #allocation2 [shape = 'u8[196608]{0}', space=vmem, size = 0x30000, scoped, tag = 'input window, operand 2, single buffered']
    #allocation3 [shape = 's32[1]{0}', space=sflag, size = 0x4, scoped, tag = 'scoped memory for tpu_custom_call.1']
    #allocation4 [shape = 's32[1]{0}', space=sflag, size = 0x4, scoped, tag = 'scoped memory for tpu_custom_call.1']
    #allocation5 [shape = 'u8[4096]{0}', space=vmem, size = 0x1000, scoped, tag = 'output window, operand 0, single buffered']
    %15 = vsyncpa [#allocation3], 0
    %16 = vsyncpa [#allocation4], 0
    // Predicated region
    $region2: #{tpu_custom_call.1} parent=1 // pred_check
      _
    $region3: #{tpu_custom_call.1} parent=1 // pred_check_branch
      %18 = sbr.rel (0) target = $region5
    $region4: #{tpu_custom_call.1} parent=1 // pred_region
      _
    $region5: #{tpu_custom_call.1} parent=1 // pred_fallthru
      _
    // Predicated region
    $region6: #{tpu_custom_call.1} parent=1 // pred_check
      _
    $region7: #{tpu_custom_call.1} parent=1 // pred_check_branch
      %20 = sbr.rel (0) target = $region9
    $region8: #{tpu_custom_call.1} parent=1 // pred_region
      _
    $region9: #{tpu_custom_call.1} parent=1 // pred_fallthru
      _
    // Predicated region
    $region10: #{tpu_custom_call.1} parent=1 // pred_check
      _
    $region11: #{tpu_custom_call.1} parent=1 // pred_check_branch
      %22 = sbr.rel (0) target = $region13
    $region12: #{tpu_custom_call.1} parent=1 // pred_region
      %s24 = ssub.s32 6144, 6144
      %25 = vsyncadd [#allocation3], %s24
      %s26 = sshll.u32 [#allocation2], 4
      %s27 = int_to_ptr.vmem [resolvable:$true] %s26
      %32 = dma.hbm_to_vmem [thread:$0]  %s2, 6144, %s27, [#allocation3], 64, 64, 4
    $region13: #{tpu_custom_call.1} parent=1 // pred_fallthru
      _
    // Predicated region
    $region14: #{tpu_custom_call.1} parent=1 // pred_check
      _
    $region15: #{tpu_custom_call.1} parent=1 // pred_check_branch
      %34 = sbr.rel (0) target = $region17
    $region16: #{tpu_custom_call.1} parent=1 // pred_region
      _
    $region17: #{tpu_custom_call.1} parent=1 // pred_fallthru
      _
    // Predicated region
    $region18: #{tpu_custom_call.1} parent=1 // pred_check
      _
    $region19: #{tpu_custom_call.1} parent=1 // pred_check_branch
      %36 = sbr.rel (0) target = $region21
    $region20: #{tpu_custom_call.1} parent=1 // pred_region
      _
    $region21: #{tpu_custom_call.1} parent=1 // pred_fallthru
      _
    // Predicated region
    $region22: #{tpu_custom_call.1} parent=1 // pred_check
      _
    $region23: #{tpu_custom_call.1} parent=1 // pred_check_branch
      %38 = sbr.rel (0) target = $region25
    $region24: #{tpu_custom_call.1} parent=1 // pred_region
      _
    $region25: #{tpu_custom_call.1} parent=1 // pred_fallthru
      _
    // Predicated region
    $region26: #{tpu_custom_call.1} parent=1 // pred_check
      _
    $region27: #{tpu_custom_call.1} parent=1 // pred_check_branch
      %40 = sbr.rel (0) target = $region29
    $region28: #{tpu_custom_call.1} parent=1 // pred_region
      _
    $region29: #{tpu_custom_call.1} parent=1 // pred_fallthru
      _
    // Predicated region
    $region30: #{tpu_custom_call.1} parent=1 // pred_check
      _
    $region31: #{tpu_custom_call.1} parent=1 // pred_check_branch
      %42 = sbr.rel (0) target = $region33
    $region32: #{tpu_custom_call.1} parent=1 // pred_region
      _
    $region33: #{tpu_custom_call.1} parent=1 // pred_fallthru
      _
    // Predicated region
    $region34: #{tpu_custom_call.1} parent=1 // pred_check
      _
    $region35: #{tpu_custom_call.1} parent=1 // pred_check_branch
      %44 = sbr.rel (0) target = $region37
    $region36: #{tpu_custom_call.1} parent=1 // pred_region
      _
    $region37: #{tpu_custom_call.1} parent=1 // pred_fallthru
      _
    // Predicated region
    $region38: #{tpu_custom_call.1} parent=1 // pred_check
      _
    $region39: #{tpu_custom_call.1} parent=1 // pred_check_branch
      %46 = sbr.rel (0) target = $region41
    $region40: #{tpu_custom_call.1} parent=1 // pred_region
      _
    $region41: #{tpu_custom_call.1} parent=1 // pred_fallthru
      _
    // Predicated region
    $region42: #{tpu_custom_call.1} parent=1 // pred_check
      _
    $region43: #{tpu_custom_call.1} parent=1 // pred_check_branch
      %48 = sbr.rel (0) target = $region45
    $region44: #{tpu_custom_call.1} parent=1 // pred_region
      %49 = dma.done [#allocation3], 6144
    $region45: #{tpu_custom_call.1} parent=1 // pred_fallthru
      _
    %v51 = vld [vmem:[%s0] sm:$0xff]
    %v52 = vld [vmem:[%s0 + $0x8] sm:$0xff]
    %v53 = vld [vmem:[%s0 + $0x10] sm:$0xff]
    %v54 = vld [vmem:[#allocation2] sm:$0xf]
    %v55 = vld [vmem:[#allocation2 + $0x4] sm:$0xf]
    %v56 = vld [vmem:[#allocation2 + $0x8] sm:$0xf]
    %v57 = vld [vmem:[#allocation2 + $0xc] sm:$0xf]
    %v58 = vld [vmem:[#allocation2 + $0x10] sm:$0xf]
    %v59 = vld [vmem:[#allocation2 + $0x14] sm:$0xf]
    %v60 = vld [vmem:[#allocation2 + $0x18] sm:$0xf]
    %v61 = vld [vmem:[#allocation2 + $0x1c] sm:$0xf]
    %v62 = vld [vmem:[#allocation2 + $0x20] sm:$0xf]
    %v63 = vld [vmem:[#allocation2 + $0x24] sm:$0xf]
    %v64 = vld [vmem:[#allocation2 + $0x28] sm:$0xf]
    %v65 = vld [vmem:[#allocation2 + $0x2c] sm:$0xf]
    %v66 = vld [vmem:[#allocation2 + $0x30] sm:$0xf]
    %v67 = vld [vmem:[#allocation2 + $0x34] sm:$0xf]
    %v68 = vld [vmem:[#allocation2 + $0x38] sm:$0xf]
    %v69 = vld [vmem:[#allocation2 + $0x3c] sm:$0xf]
    %v70 = vld [vmem:[#allocation2 + $0x40] sm:$0xf]
    %v71 = vld [vmem:[#allocation2 + $0x44] sm:$0xf]
    %v72 = vld [vmem:[#allocation2 + $0x48] sm:$0xf]
    %v73 = vld [vmem:[#allocation2 + $0x4c] sm:$0xf]
    %v74 = vld [vmem:[#allocation2 + $0x50] sm:$0xf]
    %v75 = vld [vmem:[#allocation2 + $0x54] sm:$0xf]
    %v76 = vld [vmem:[#allocation2 + $0x58] sm:$0xf]
    %v77 = vld [vmem:[#allocation2 + $0x5c] sm:$0xf]
    %v78 = vld [vmem:[#allocation2 + $0x60] sm:$0xf]
    %v79 = vld [vmem:[#allocation2 + $0x64] sm:$0xf]
    %v80 = vld [vmem:[#allocation2 + $0x68] sm:$0xf]
    %v81 = vld [vmem:[#allocation2 + $0x6c] sm:$0xf]
    %v82 = vld [vmem:[#allocation2 + $0x70] sm:$0xf]
    %v83 = vld [vmem:[#allocation2 + $0x74] sm:$0xf]
    %v84 = vld [vmem:[#allocation2 + $0x78] sm:$0xf]
    %v85 = vld [vmem:[#allocation2 + $0x7c] sm:$0xf]
    %v86 = vld [vmem:[#allocation2 + $0x80] sm:$0xf]
    %v87 = vld [vmem:[#allocation2 + $0x84] sm:$0xf]
    %v88 = vld [vmem:[#allocation2 + $0x88] sm:$0xf]
    %v89 = vld [vmem:[#allocation2 + $0x8c] sm:$0xf]
    %v90 = vld [vmem:[#allocation2 + $0x90] sm:$0xf]
    %v91 = vld [vmem:[#allocation2 + $0x94] sm:$0xf]
    %v92 = vld [vmem:[#allocation2 + $0x98] sm:$0xf]
    %v93 = vld [vmem:[#allocation2 + $0x9c] sm:$0xf]
    %v94 = vld [vmem:[#allocation2 + $0xa0] sm:$0xf]
    %v95 = vld [vmem:[#allocation2 + $0xa4] sm:$0xf]
    %v96 = vld [vmem:[#allocation2 + $0xa8] sm:$0xf]
    %v97 = vld [vmem:[#allocation2 + $0xac] sm:$0xf]
    %v98 = vld [vmem:[#allocation2 + $0xb0] sm:$0xf]
    %v99 = vld [vmem:[#allocation2 + $0xb4] sm:$0xf]
    %v100 = vld [vmem:[#allocation2 + $0xb8] sm:$0xf]
    %v101 = vld [vmem:[#allocation2 + $0xbc] sm:$0xf]
    %v102 = vld [vmem:[#allocation2 + $0xc0] sm:$0xf]
    %v103 = vld [vmem:[#allocation2 + $0xc4] sm:$0xf]
    %v104 = vld [vmem:[#allocation2 + $0xc8] sm:$0xf]
    %v105 = vld [vmem:[#allocation2 + $0xcc] sm:$0xf]
    %v106 = vld [vmem:[#allocation2 + $0xd0] sm:$0xf]
    %v107 = vld [vmem:[#allocation2 + $0xd4] sm:$0xf]
    %v108 = vld [vmem:[#allocation2 + $0xd8] sm:$0xf]
    %v109 = vld [vmem:[#allocation2 + $0xdc] sm:$0xf]
    %v110 = vld [vmem:[#allocation2 + $0xe0] sm:$0xf]
    %v111 = vld [vmem:[#allocation2 + $0xe4] sm:$0xf]
    %v112 = vld [vmem:[#allocation2 + $0xe8] sm:$0xf]
    %v113 = vld [vmem:[#allocation2 + $0xec] sm:$0xf]
    %v114 = vld [vmem:[#allocation2 + $0xf0] sm:$0xf]
    %v115 = vld [vmem:[#allocation2 + $0xf4] sm:$0xf]
    %v116 = vld [vmem:[#allocation2 + $0xf8] sm:$0xf]
    %v117 = vld [vmem:[#allocation2 + $0xfc] sm:$0xf]
    %v118 = vld [vmem:[#allocation2 + $0x100] sm:$0xf]
    %v119 = vld [vmem:[#allocation2 + $0x104] sm:$0xf]
    %v120 = vld [vmem:[#allocation2 + $0x108] sm:$0xf]
    %v121 = vld [vmem:[#allocation2 + $0x10c] sm:$0xf]
    %v122 = vld [vmem:[#allocation2 + $0x110] sm:$0xf]
    %v123 = vld [vmem:[#allocation2 + $0x114] sm:$0xf]
    %v124 = vld [vmem:[#allocation2 + $0x118] sm:$0xf]
    %v125 = vld [vmem:[#allocation2 + $0x11c] sm:$0xf]
    %v126 = vld [vmem:[#allocation2 + $0x120] sm:$0xf]
    %v127 = vld [vmem:[#allocation2 + $0x124] sm:$0xf]
    %v128 = vld [vmem:[#allocation2 + $0x128] sm:$0xf]
    %v129 = vld [vmem:[#allocation2 + $0x12c] sm:$0xf]
    %v130 = vld [vmem:[#allocation2 + $0x130] sm:$0xf]
    %v131 = vld [vmem:[#allocation2 + $0x134] sm:$0xf]
    %v132 = vld [vmem:[#allocation2 + $0x138] sm:$0xf]
    %v133 = vld [vmem:[#allocation2 + $0x13c] sm:$0xf]
    %v134 = vld [vmem:[#allocation2 + $0x140] sm:$0xf]
    %v135 = vld [vmem:[#allocation2 + $0x144] sm:$0xf]
    %v136 = vld [vmem:[#allocation2 + $0x148] sm:$0xf]
    %v137 = vld [vmem:[#allocation2 + $0x14c] sm:$0xf]
    %v138 = vld [vmem:[#allocation2 + $0x150] sm:$0xf]
    %v139 = vld [vmem:[#allocation2 + $0x154] sm:$0xf]
    %v140 = vld [vmem:[#allocation2 + $0x158] sm:$0xf]
    %v141 = vld [vmem:[#allocation2 + $0x15c] sm:$0xf]
    %v142 = vld [vmem:[#allocation2 + $0x160] sm:$0xf]
    %v143 = vld [vmem:[#allocation2 + $0x164] sm:$0xf]
    %v144 = vld [vmem:[#allocation2 + $0x168] sm:$0xf]
    %v145 = vld [vmem:[#allocation2 + $0x16c] sm:$0xf]
    %v146 = vld [vmem:[#allocation2 + $0x170] sm:$0xf]
    %v147 = vld [vmem:[#allocation2 + $0x174] sm:$0xf]
    %v148 = vld [vmem:[#allocation2 + $0x178] sm:$0xf]
    %v149 = vld [vmem:[#allocation2 + $0x17c] sm:$0xf]
    %v153 = vunpack.c.l.b16 %v51
    %v154 = vunpack.c.h.b16 %v51
    %v155 = vunpack.c.l.b16 %v52
    %v156 = vunpack.c.h.b16 %v52
    %v157 = vunpack.c.l.b16 %v53
    %v158 = vunpack.c.h.b16 %v53
    %v159 = vpack.c.b16 %v153, %v153
    %v160 = vpack.c.b16 %v154, %v154
    %v161 = vpack.c.b16 %v155, %v155
    %v162 = vpack.c.b16 %v156, %v156
    %v163 = vpack.c.b16 %v157, %v157
    %v164 = vpack.c.b16 %v158, %v158
    %v267 = vunpack.c.l.b16 %v54
    %v268 = vunpack.c.l.b16 %v55
    %v269 = vunpack.c.l.b16 %v56
    %v270 = vunpack.c.l.b16 %v57
    %v271 = vunpack.c.l.b16 %v58
    %v272 = vunpack.c.l.b16 %v59
    %v273 = vunpack.c.l.b16 %v60
    %v274 = vunpack.c.l.b16 %v61
    %v275 = vunpack.c.l.b16 %v62
    %v276 = vunpack.c.l.b16 %v63
    %v277 = vunpack.c.l.b16 %v64
    %v278 = vunpack.c.l.b16 %v65
    %v279 = vunpack.c.l.b16 %v66
    %v280 = vunpack.c.l.b16 %v67
    %v281 = vunpack.c.l.b16 %v68
    %v282 = vunpack.c.l.b16 %v69
    %v283 = vunpack.c.l.b16 %v70
    %v284 = vunpack.c.l.b16 %v71
    %v285 = vunpack.c.l.b16 %v72
    %v286 = vunpack.c.l.b16 %v73
    %v287 = vunpack.c.l.b16 %v74
    %v288 = vunpack.c.l.b16 %v75
    %v289 = vunpack.c.l.b16 %v76
    %v290 = vunpack.c.l.b16 %v77
    %v291 = vunpack.c.l.b16 %v78
    %v292 = vunpack.c.l.b16 %v79
    %v293 = vunpack.c.l.b16 %v80
    %v294 = vunpack.c.l.b16 %v81
    %v295 = vunpack.c.l.b16 %v82
    %v296 = vunpack.c.l.b16 %v83
    %v297 = vunpack.c.l.b16 %v84
    %v298 = vunpack.c.l.b16 %v85
    %v299 = vunpack.c.l.b16 %v86
    %v300 = vunpack.c.l.b16 %v87
    %v301 = vunpack.c.l.b16 %v88
    %v302 = vunpack.c.l.b16 %v89
    %v303 = vunpack.c.l.b16 %v90
    %v304 = vunpack.c.l.b16 %v91
    %v305 = vunpack.c.l.b16 %v92
    %v306 = vunpack.c.l.b16 %v93
    %v307 = vunpack.c.l.b16 %v94
    %v308 = vunpack.c.l.b16 %v95
    %v309 = vunpack.c.l.b16 %v96
    %v310 = vunpack.c.l.b16 %v97
    %v311 = vunpack.c.l.b16 %v98
    %v312 = vunpack.c.l.b16 %v99
    %v313 = vunpack.c.l.b16 %v100
    %v314 = vunpack.c.l.b16 %v101
    %v315 = vunpack.c.l.b16 %v102
    %v316 = vunpack.c.l.b16 %v103
    %v317 = vunpack.c.l.b16 %v104
    %v318 = vunpack.c.l.b16 %v105
    %v319 = vunpack.c.l.b16 %v106
    %v320 = vunpack.c.l.b16 %v107
    %v321 = vunpack.c.l.b16 %v108
    %v322 = vunpack.c.l.b16 %v109
    %v323 = vunpack.c.l.b16 %v110
    %v324 = vunpack.c.l.b16 %v111
    %v325 = vunpack.c.l.b16 %v112
    %v326 = vunpack.c.l.b16 %v113
    %v327 = vunpack.c.l.b16 %v114
    %v328 = vunpack.c.l.b16 %v115
    %v329 = vunpack.c.l.b16 %v116
    %v330 = vunpack.c.l.b16 %v117
    %v331 = vunpack.c.l.b16 %v118
    %v332 = vunpack.c.l.b16 %v119
    %v333 = vunpack.c.l.b16 %v120
    %v334 = vunpack.c.l.b16 %v121
    %v335 = vunpack.c.l.b16 %v122
    %v336 = vunpack.c.l.b16 %v123
    %v337 = vunpack.c.l.b16 %v124
    %v338 = vunpack.c.l.b16 %v125
    %v339 = vunpack.c.l.b16 %v126
    %v340 = vunpack.c.l.b16 %v127
    %v341 = vunpack.c.l.b16 %v128
    %v342 = vunpack.c.l.b16 %v129
    %v343 = vunpack.c.l.b16 %v130
    %v344 = vunpack.c.l.b16 %v131
    %v345 = vunpack.c.l.b16 %v132
    %v346 = vunpack.c.l.b16 %v133
    %v347 = vunpack.c.l.b16 %v134
    %v348 = vunpack.c.l.b16 %v135
    %v349 = vunpack.c.l.b16 %v136
    %v350 = vunpack.c.l.b16 %v137
    %v351 = vunpack.c.l.b16 %v138
    %v352 = vunpack.c.l.b16 %v139
    %v353 = vunpack.c.l.b16 %v140
    %v354 = vunpack.c.l.b16 %v141
    %v355 = vunpack.c.l.b16 %v142
    %v356 = vunpack.c.l.b16 %v143
    %v357 = vunpack.c.l.b16 %v144
    %v358 = vunpack.c.l.b16 %v145
    %v359 = vunpack.c.l.b16 %v146
    %v360 = vunpack.c.l.b16 %v147
    %v361 = vunpack.c.l.b16 %v148
    %v362 = vunpack.c.l.b16 %v149
    %v363 = vpack.c.b16 %v268, %v267
    %v364 = vpack.c.b16 %v270, %v269
    %v365 = vpack.c.b16 %v272, %v271
    %v366 = vpack.c.b16 %v274, %v273
    %v367 = vpack.c.b16 %v276, %v275
    %v368 = vpack.c.b16 %v278, %v277
    %v369 = vpack.c.b16 %v280, %v279
    %v370 = vpack.c.b16 %v282, %v281
    %v371 = vpack.c.b16 %v284, %v283
    %v372 = vpack.c.b16 %v286, %v285
    %v373 = vpack.c.b16 %v288, %v287
    %v374 = vpack.c.b16 %v290, %v289
    %v375 = vpack.c.b16 %v292, %v291
    %v376 = vpack.c.b16 %v294, %v293
    %v377 = vpack.c.b16 %v296, %v295
    %v378 = vpack.c.b16 %v298, %v297
    %v379 = vpack.c.b16 %v300, %v299
    %v380 = vpack.c.b16 %v302, %v301
    %v381 = vpack.c.b16 %v304, %v303
    %v382 = vpack.c.b16 %v306, %v305
    %v383 = vpack.c.b16 %v308, %v307
    %v384 = vpack.c.b16 %v310, %v309
    %v385 = vpack.c.b16 %v312, %v311
    %v386 = vpack.c.b16 %v314, %v313
    %v387 = vpack.c.b16 %v316, %v315
    %v388 = vpack.c.b16 %v318, %v317
    %v389 = vpack.c.b16 %v320, %v319
    %v390 = vpack.c.b16 %v322, %v321
    %v391 = vpack.c.b16 %v324, %v323
    %v392 = vpack.c.b16 %v326, %v325
    %v393 = vpack.c.b16 %v328, %v327
    %v394 = vpack.c.b16 %v330, %v329
    %v395 = vpack.c.b16 %v332, %v331
    %v396 = vpack.c.b16 %v334, %v333
    %v397 = vpack.c.b16 %v336, %v335
    %v398 = vpack.c.b16 %v338, %v337
    %v399 = vpack.c.b16 %v340, %v339
    %v400 = vpack.c.b16 %v342, %v341
    %v401 = vpack.c.b16 %v344, %v343
    %v402 = vpack.c.b16 %v346, %v345
    %v403 = vpack.c.b16 %v348, %v347
    %v404 = vpack.c.b16 %v350, %v349
    %v405 = vpack.c.b16 %v352, %v351
    %v406 = vpack.c.b16 %v354, %v353
    %v407 = vpack.c.b16 %v356, %v355
    %v408 = vpack.c.b16 %v358, %v357
    %v409 = vpack.c.b16 %v360, %v359
    %v410 = vpack.c.b16 %v362, %v361
    %459 = vmatprep.subr.bf16.mxu0 0
    %460 = vmatpush1.bf16.msra.mxu0 %v363
    %461 = vmatprep.subr.bf16.mxu0 0
    %462 = vmatpush1.bf16.msra.mxu0 %v364
    %463 = vmatprep.subr.bf16.mxu0 0
    %464 = vmatpush1.bf16.msra.mxu0 %v365
    %465 = vmatprep.subr.bf16.mxu0 0
    %466 = vmatpush1.bf16.msra.mxu0 %v366
    %467 = vmatprep.subr.bf16.mxu0 0
    %468 = vmatpush1.bf16.msra.mxu0 %v367
    %469 = vmatprep.subr.bf16.mxu0 0
    %470 = vmatpush1.bf16.msra.mxu0 %v368
    %471 = vmatprep.subr.bf16.mxu0 0
    %472 = vmatpush1.bf16.msra.mxu0 %v369
    %473 = vmatprep.subr.bf16.mxu0 0
    %474 = vmatpush1.bf16.msra.mxu0 %v370
    %475 = vmatprep.subr.bf16.mxu0 0
    %476 = vmatpush1.bf16.msra.mxu0 %v371
    %477 = vmatprep.subr.bf16.mxu0 0
    %478 = vmatpush1.bf16.msra.mxu0 %v372
    %479 = vmatprep.subr.bf16.mxu0 0
    %480 = vmatpush1.bf16.msra.mxu0 %v373
    %481 = vmatprep.subr.bf16.mxu0 0
    %482 = vmatpush1.bf16.msra.mxu0 %v374
    %483 = vmatprep.subr.bf16.mxu0 0
    %484 = vmatpush1.bf16.msra.mxu0 %v375
    %485 = vmatprep.subr.bf16.mxu0 0
    %486 = vmatpush1.bf16.msra.mxu0 %v376
    %487 = vmatprep.subr.bf16.mxu0 0
    %488 = vmatpush1.bf16.msra.mxu0 %v377
    %489 = vmatprep.subr.bf16.mxu0 0
    %490 = vmatpush1.bf16.msra.mxu0 %v378
    %491 = vmatprep.mubr.bf16.mxu0 %v160
    %492 = vmatmul.mubr.bf16.gmra.mrb[0].mxu0 %v159
    %v493 = vpop.f32.mrb[0].mxu0
    %v494 = vadd.f32 0.0, %v493
    %v495 = vpop.f32.mrb[0].mxu0
    %v496 = vpop.f32.mrb[0].mxu0
    %v497 = vpop.f32.mrb[0].mxu0
    %498 = vdwg.mxu0
    %499 = vmatprep.subr.bf16.mxu0 0
    %500 = vmatpush1.bf16.msra.mxu0 %v379
    %501 = vmatprep.subr.bf16.mxu0 0
    %502 = vmatpush1.bf16.msra.mxu0 %v380
    %503 = vmatprep.subr.bf16.mxu0 0
    %504 = vmatpush1.bf16.msra.mxu0 %v381
    %505 = vmatprep.subr.bf16.mxu0 0
    %506 = vmatpush1.bf16.msra.mxu0 %v382
    %507 = vmatprep.subr.bf16.mxu0 0
    %508 = vmatpush1.bf16.msra.mxu0 %v383
    %509 = vmatprep.subr.bf16.mxu0 0
    %510 = vmatpush1.bf16.msra.mxu0 %v384
    %511 = vmatprep.subr.bf16.mxu0 0
    %512 = vmatpush1.bf16.msra.mxu0 %v385
    %513 = vmatprep.subr.bf16.mxu0 0
    %514 = vmatpush1.bf16.msra.mxu0 %v386
    %515 = vmatprep.subr.bf16.mxu0 0
    %516 = vmatpush1.bf16.msra.mxu0 %v387
    %517 = vmatprep.subr.bf16.mxu0 0
    %518 = vmatpush1.bf16.msra.mxu0 %v388
    %519 = vmatprep.subr.bf16.mxu0 0
    %520 = vmatpush1.bf16.msra.mxu0 %v389
    %521 = vmatprep.subr.bf16.mxu0 0
    %522 = vmatpush1.bf16.msra.mxu0 %v390
    %523 = vmatprep.subr.bf16.mxu0 0
    %524 = vmatpush1.bf16.msra.mxu0 %v391
    %525 = vmatprep.subr.bf16.mxu0 0
    %526 = vmatpush1.bf16.msra.mxu0 %v392
    %527 = vmatprep.subr.bf16.mxu0 0
    %528 = vmatpush1.bf16.msra.mxu0 %v393
    %529 = vmatprep.subr.bf16.mxu0 0
    %530 = vmatpush1.bf16.msra.mxu0 %v394
    %531 = vmatprep.mubr.bf16.mxu0 %v162
    %532 = vmatmul.mubr.bf16.gmra.mrb[0].mxu0 %v161
    %v533 = vpop.f32.mrb[0].mxu0
    %v534 = vadd.f32 %v494, %v533
    %v535 = vpop.f32.mrb[0].mxu0
    %v536 = vpop.f32.mrb[0].mxu0
    %v537 = vpop.f32.mrb[0].mxu0
    %538 = vdwg.mxu0
    %539 = vmatprep.subr.bf16.mxu0 0
    %540 = vmatpush1.bf16.msra.mxu0 %v395
    %541 = vmatprep.subr.bf16.mxu0 0
    %542 = vmatpush1.bf16.msra.mxu0 %v396
    %543 = vmatprep.subr.bf16.mxu0 0
    %544 = vmatpush1.bf16.msra.mxu0 %v397
    %545 = vmatprep.subr.bf16.mxu0 0
    %546 = vmatpush1.bf16.msra.mxu0 %v398
    %547 = vmatprep.subr.bf16.mxu0 0
    %548 = vmatpush1.bf16.msra.mxu0 %v399
    %549 = vmatprep.subr.bf16.mxu0 0
    %550 = vmatpush1.bf16.msra.mxu0 %v400
    %551 = vmatprep.subr.bf16.mxu0 0
    %552 = vmatpush1.bf16.msra.mxu0 %v401
    %553 = vmatprep.subr.bf16.mxu0 0
    %554 = vmatpush1.bf16.msra.mxu0 %v402
    %555 = vmatprep.subr.bf16.mxu0 0
    %556 = vmatpush1.bf16.msra.mxu0 %v403
    %557 = vmatprep.subr.bf16.mxu0 0
    %558 = vmatpush1.bf16.msra.mxu0 %v404
    %559 = vmatprep.subr.bf16.mxu0 0
    %560 = vmatpush1.bf16.msra.mxu0 %v405
    %561 = vmatprep.subr.bf16.mxu0 0
    %562 = vmatpush1.bf16.msra.mxu0 %v406
    %563 = vmatprep.subr.bf16.mxu0 0
    %564 = vmatpush1.bf16.msra.mxu0 %v407
    %565 = vmatprep.subr.bf16.mxu0 0
    %566 = vmatpush1.bf16.msra.mxu0 %v408
    %567 = vmatprep.subr.bf16.mxu0 0
    %568 = vmatpush1.bf16.msra.mxu0 %v409
    %569 = vmatprep.subr.bf16.mxu0 0
    %570 = vmatpush1.bf16.msra.mxu0 %v410
    %571 = vmatprep.mubr.bf16.mxu0 %v164
    %572 = vmatmul.mubr.bf16.gmra.mrb[0].mxu0 %v163
    %v573 = vpop.f32.mrb[0].mxu0
    %v574 = vadd.f32 %v534, %v573
    %v575 = vpop.f32.mrb[0].mxu0
    %v576 = vpop.f32.mrb[0].mxu0
    %v577 = vpop.f32.mrb[0].mxu0
    %578 = vdwg.mxu0
    %v579 = vpack.c.bf16 %v574, %v574
    %v580 = vld [vmem:[%s3] sm:$0xff]
    %v581 = vld [vmem:[%s3 + $0x8] sm:$0xff]
    %v582 = vld [vmem:[%s3 + $0x10] sm:$0xff]
    %v583 = vld [vmem:[%s3 + $0x18] sm:$0xff]
    %v584 = vld [vmem:[%s3 + $0x20] sm:$0xff]
    %v585 = vld [vmem:[%s3 + $0x28] sm:$0xff]
    %v586 = vld [vmem:[%s3 + $0x30] sm:$0xff]
    %v587 = vld [vmem:[%s3 + $0x38] sm:$0xff]
    %v588 = vld [vmem:[%s3 + $0x40] sm:$0xff]
    %v589 = vld [vmem:[%s3 + $0x48] sm:$0xff]
    %v590 = vld [vmem:[%s3 + $0x50] sm:$0xff]
    %v591 = vld [vmem:[%s3 + $0x58] sm:$0xff]
    %v592 = vld [vmem:[%s3 + $0x60] sm:$0xff]
    %v593 = vld [vmem:[%s3 + $0x68] sm:$0xff]
    %v594 = vld [vmem:[%s3 + $0x70] sm:$0xff]
    %v595 = vld [vmem:[%s3 + $0x78] sm:$0xff]
    %v596 = vld [vmem:[%s1] sm:$0xff]
    %v597 = vld [vmem:[%s4] sm:$0x3]
    %599 = vset.pattern.permute.xlu0 0
    %600 = vperm.xlu0 %599, %v596
    %v601 = vpop.permute.xlu0 %600
    %v604 = vlaneseq
    %v605 = vshrl.u32 %v604, 7
    %v606 = vsub.s32 0, %v605
    %v607 = vrot.slane %v597, %v606
    %v608 = vlaneseq
    %v609 = vshrl.u32 %v608, 7
    %v610 = vsub.s32 1, %v609
    %v611 = vrot.slane %v597, %v610
    %v614 = vmul.f32 %v601, %v607
    %v615 = vmul.f32 %v601, %v611
    %v632 = vunpack.c.l.b16 %v580
    %v633 = vunpack.c.h.b16 %v580
    %v634 = vunpack.c.l.b16 %v581
    %v635 = vunpack.c.h.b16 %v581
    %v636 = vunpack.c.l.b16 %v582
    %v637 = vunpack.c.h.b16 %v582
    %v638 = vunpack.c.l.b16 %v583
    %v639 = vunpack.c.h.b16 %v583
    %v640 = vunpack.c.l.b16 %v584
    %v641 = vunpack.c.h.b16 %v584
    %v642 = vunpack.c.l.b16 %v585
    %v643 = vunpack.c.h.b16 %v585
    %v644 = vunpack.c.l.b16 %v586
    %v645 = vunpack.c.h.b16 %v586
    %v646 = vunpack.c.l.b16 %v587
    %v647 = vunpack.c.h.b16 %v587
    %v648 = vunpack.c.l.b16 %v588
    %v649 = vunpack.c.h.b16 %v588
    %v650 = vunpack.c.l.b16 %v589
    %v651 = vunpack.c.h.b16 %v589
    %v652 = vunpack.c.l.b16 %v590
    %v653 = vunpack.c.h.b16 %v590
    %v654 = vunpack.c.l.b16 %v591
    %v655 = vunpack.c.h.b16 %v591
    %v656 = vunpack.c.l.b16 %v592
    %v657 = vunpack.c.h.b16 %v592
    %v658 = vunpack.c.l.b16 %v593
    %v659 = vunpack.c.h.b16 %v593
    %v660 = vunpack.c.l.b16 %v594
    %v661 = vunpack.c.h.b16 %v594
    %v662 = vunpack.c.l.b16 %v595
    %v663 = vunpack.c.h.b16 %v595
    %v664 = vpack.c.b16 %v634, %v632
    %v665 = vpack.c.b16 %v635, %v633
    %v666 = vpack.c.b16 %v638, %v636
    %v667 = vpack.c.b16 %v639, %v637
    %v668 = vpack.c.b16 %v642, %v640
    %v669 = vpack.c.b16 %v643, %v641
    %v670 = vpack.c.b16 %v646, %v644
    %v671 = vpack.c.b16 %v647, %v645
    %v672 = vpack.c.b16 %v650, %v648
    %v673 = vpack.c.b16 %v651, %v649
    %v674 = vpack.c.b16 %v654, %v652
    %v675 = vpack.c.b16 %v655, %v653
    %v676 = vpack.c.b16 %v658, %v656
    %v677 = vpack.c.b16 %v659, %v657
    %v678 = vpack.c.b16 %v662, %v660
    %v679 = vpack.c.b16 %v663, %v661
    %696 = vmatprep.subr.bf16.mxu0 %v665
    %697 = vmatpush1.bf16.msra.mxu0 %v664
    %698 = vmatprep.subr.bf16.mxu0 %v667
    %699 = vmatpush1.bf16.msra.mxu0 %v666
    %700 = vmatprep.subr.bf16.mxu0 %v669
    %701 = vmatpush1.bf16.msra.mxu0 %v668
    %702 = vmatprep.subr.bf16.mxu0 %v671
    %703 = vmatpush1.bf16.msra.mxu0 %v670
    %704 = vmatprep.subr.bf16.mxu0 %v673
    %705 = vmatpush1.bf16.msra.mxu0 %v672
    %706 = vmatprep.subr.bf16.mxu0 %v675
    %707 = vmatpush1.bf16.msra.mxu0 %v674
    %708 = vmatprep.subr.bf16.mxu0 %v677
    %709 = vmatpush1.bf16.msra.mxu0 %v676
    %710 = vmatprep.subr.bf16.mxu0 %v679
    %711 = vmatpush1.bf16.msra.mxu0 %v678
    %712 = vmatprep.subr.bf16.mxu0 0
    %713 = vmatpush1.bf16.msra.mxu0 0
    %714 = vmatprep.subr.bf16.mxu0 0
    %715 = vmatpush1.bf16.msra.mxu0 0
    %716 = vmatprep.subr.bf16.mxu0 0
    %717 = vmatpush1.bf16.msra.mxu0 0
    %718 = vmatprep.subr.bf16.mxu0 0
    %719 = vmatpush1.bf16.msra.mxu0 0
    %720 = vmatprep.subr.bf16.mxu0 0
    %721 = vmatpush1.bf16.msra.mxu0 0
    %722 = vmatprep.subr.bf16.mxu0 0
    %723 = vmatpush1.bf16.msra.mxu0 0
    %724 = vmatprep.subr.bf16.mxu0 0
    %725 = vmatpush1.bf16.msra.mxu0 0
    %726 = vmatprep.subr.bf16.mxu0 0
    %727 = vmatpush1.bf16.msra.mxu0 0
    %728 = vmatprep.mubr.bf16.mxu0 0
    %729 = vmatmul.mubr.bf16.gmra.mrb[0].mxu0 %v579
    %v730 = vpop.f32.mrb[0].mxu0
    %v731 = vadd.f32 %v614, %v730
    %v732 = vpop.f32.mrb[0].mxu0
    %v733 = vadd.f32 %v615, %v732
    %v734 = vpop.f32.mrb[0].mxu0
    %v735 = vpop.f32.mrb[0].mxu0
    %736 = vdwg.mxu0
    %v737 = vld [vmem:[%s5] sm:$0x3]
    %v739 = vlaneseq
    %v740 = vshrl.u32 %v739, 7
    %v741 = vsub.s32 0, %v740
    %v742 = vrot.slane %v737, %v741
    %v743 = vlaneseq
    %v744 = vshrl.u32 %v743, 7
    %v745 = vsub.s32 1, %v744
    %v746 = vrot.slane %v737, %v745
    %v749 = vadd.f32 %v731, %v742
    %v750 = vadd.f32 %v733, %v746
    %v751 = vmax.f32 %v749, 0.0
    %v752 = vmax.f32 %v750, 0.0
    %v753 = vpack.c.bf16 %v751, %v751
    %v754 = vpack.c.bf16 %v752, %v752
    %v755 = vld [vmem:[%s6] sm:$0xf]
    %v756 = vld [vmem:[%s6 + $0x4] sm:$0xf]
    %v757 = vld [vmem:[%s6 + $0x8] sm:$0xf]
    %v758 = vld [vmem:[%s6 + $0xc] sm:$0xf]
    %v759 = vld [vmem:[%s6 + $0x10] sm:$0xf]
    %v760 = vld [vmem:[%s6 + $0x14] sm:$0xf]
    %v761 = vld [vmem:[%s6 + $0x18] sm:$0xf]
    %v762 = vld [vmem:[%s6 + $0x1c] sm:$0xf]
    %v763 = vld [vmem:[%s6 + $0x20] sm:$0xf]
    %v764 = vld [vmem:[%s6 + $0x24] sm:$0xf]
    %v765 = vld [vmem:[%s6 + $0x28] sm:$0xf]
    %v766 = vld [vmem:[%s6 + $0x2c] sm:$0xf]
    %v767 = vld [vmem:[%s6 + $0x30] sm:$0xf]
    %v768 = vld [vmem:[%s6 + $0x34] sm:$0xf]
    %v769 = vld [vmem:[%s6 + $0x38] sm:$0xf]
    %v770 = vld [vmem:[%s6 + $0x3c] sm:$0xf]
    %v771 = vld [vmem:[%s6 + $0x40] sm:$0xf]
    %v772 = vld [vmem:[%s6 + $0x44] sm:$0xf]
    %v773 = vld [vmem:[%s6 + $0x48] sm:$0xf]
    %v774 = vld [vmem:[%s6 + $0x4c] sm:$0xf]
    %v775 = vld [vmem:[%s6 + $0x50] sm:$0xf]
    %v776 = vld [vmem:[%s6 + $0x54] sm:$0xf]
    %v777 = vld [vmem:[%s6 + $0x58] sm:$0xf]
    %v778 = vld [vmem:[%s6 + $0x5c] sm:$0xf]
    %v779 = vld [vmem:[%s6 + $0x60] sm:$0xf]
    %v780 = vld [vmem:[%s6 + $0x64] sm:$0xf]
    %v781 = vld [vmem:[%s6 + $0x68] sm:$0xf]
    %v782 = vld [vmem:[%s6 + $0x6c] sm:$0xf]
    %v783 = vld [vmem:[%s6 + $0x70] sm:$0xf]
    %v784 = vld [vmem:[%s6 + $0x74] sm:$0xf]
    %v785 = vld [vmem:[%s6 + $0x78] sm:$0xf]
    %v786 = vld [vmem:[%s6 + $0x7c] sm:$0xf]
    %v787 = vld [vmem:[%s7] sm:$0x1]
    %v789 = vlaneseq
    %v790 = vshrl.u32 %v789, 7
    %v791 = vsub.s32 0, %v790
    %v792 = vrot.slane %v787, %v791
    %v826 = vunpack.c.l.b16 %v755
    %v827 = vunpack.c.l.b16 %v756
    %v828 = vunpack.c.l.b16 %v757
    %v829 = vunpack.c.l.b16 %v758
    %v830 = vunpack.c.l.b16 %v759
    %v831 = vunpack.c.l.b16 %v760
    %v832 = vunpack.c.l.b16 %v761
    %v833 = vunpack.c.l.b16 %v762
    %v834 = vunpack.c.l.b16 %v763
    %v835 = vunpack.c.l.b16 %v764
    %v836 = vunpack.c.l.b16 %v765
    %v837 = vunpack.c.l.b16 %v766
    %v838 = vunpack.c.l.b16 %v767
    %v839 = vunpack.c.l.b16 %v768
    %v840 = vunpack.c.l.b16 %v769
    %v841 = vunpack.c.l.b16 %v770
    %v842 = vunpack.c.l.b16 %v771
    %v843 = vunpack.c.l.b16 %v772
    %v844 = vunpack.c.l.b16 %v773
    %v845 = vunpack.c.l.b16 %v774
    %v846 = vunpack.c.l.b16 %v775
    %v847 = vunpack.c.l.b16 %v776
    %v848 = vunpack.c.l.b16 %v777
    %v849 = vunpack.c.l.b16 %v778
    %v850 = vunpack.c.l.b16 %v779
    %v851 = vunpack.c.l.b16 %v780
    %v852 = vunpack.c.l.b16 %v781
    %v853 = vunpack.c.l.b16 %v782
    %v854 = vunpack.c.l.b16 %v783
    %v855 = vunpack.c.l.b16 %v784
    %v856 = vunpack.c.l.b16 %v785
    %v857 = vunpack.c.l.b16 %v786
    %v858 = vpack.c.b16 %v827, %v826
    %v859 = vpack.c.b16 %v829, %v828
    %v860 = vpack.c.b16 %v831, %v830
    %v861 = vpack.c.b16 %v833, %v832
    %v862 = vpack.c.b16 %v835, %v834
    %v863 = vpack.c.b16 %v837, %v836
    %v864 = vpack.c.b16 %v839, %v838
    %v865 = vpack.c.b16 %v841, %v840
    %v866 = vpack.c.b16 %v843, %v842
    %v867 = vpack.c.b16 %v845, %v844
    %v868 = vpack.c.b16 %v847, %v846
    %v869 = vpack.c.b16 %v849, %v848
    %v870 = vpack.c.b16 %v851, %v850
    %v871 = vpack.c.b16 %v853, %v852
    %v872 = vpack.c.b16 %v855, %v854
    %v873 = vpack.c.b16 %v857, %v856
    %890 = vmatprep.subr.bf16.mxu0 0
    %891 = vmatpush1.bf16.msra.mxu0 %v858
    %892 = vmatprep.subr.bf16.mxu0 0
    %893 = vmatpush1.bf16.msra.mxu0 %v859
    %894 = vmatprep.subr.bf16.mxu0 0
    %895 = vmatpush1.bf16.msra.mxu0 %v860
    %896 = vmatprep.subr.bf16.mxu0 0
    %897 = vmatpush1.bf16.msra.mxu0 %v861
    %898 = vmatprep.subr.bf16.mxu0 0
    %899 = vmatpush1.bf16.msra.mxu0 %v862
    %900 = vmatprep.subr.bf16.mxu0 0
    %901 = vmatpush1.bf16.msra.mxu0 %v863
    %902 = vmatprep.subr.bf16.mxu0 0
    %903 = vmatpush1.bf16.msra.mxu0 %v864
    %904 = vmatprep.subr.bf16.mxu0 0
    %905 = vmatpush1.bf16.msra.mxu0 %v865
    %906 = vmatprep.subr.bf16.mxu0 0
    %907 = vmatpush1.bf16.msra.mxu0 %v866
    %908 = vmatprep.subr.bf16.mxu0 0
    %909 = vmatpush1.bf16.msra.mxu0 %v867
    %910 = vmatprep.subr.bf16.mxu0 0
    %911 = vmatpush1.bf16.msra.mxu0 %v868
    %912 = vmatprep.subr.bf16.mxu0 0
    %913 = vmatpush1.bf16.msra.mxu0 %v869
    %914 = vmatprep.subr.bf16.mxu0 0
    %915 = vmatpush1.bf16.msra.mxu0 %v870
    %916 = vmatprep.subr.bf16.mxu0 0
    %917 = vmatpush1.bf16.msra.mxu0 %v871
    %918 = vmatprep.subr.bf16.mxu0 0
    %919 = vmatpush1.bf16.msra.mxu0 %v872
    %920 = vmatprep.subr.bf16.mxu0 0
    %921 = vmatpush1.bf16.msra.mxu0 %v873
    %922 = vmatprep.mubr.bf16.mxu0 %v754
    %923 = vmatmul.mubr.bf16.gmra.mrb[0].mxu0 %v753
    %v924 = vpop.f32.mrb[0].mxu0
    %v925 = vadd.f32 %v792, %v924
    %v926 = vpop.f32.mrb[0].mxu0
    %v927 = vpop.f32.mrb[0].mxu0
    %v928 = vpop.f32.mrb[0].mxu0
    %929 = vdwg.mxu0
    %v930 = vmax.f32 %v925, 0.0
    %v931 = vpack.c.bf16 %v930, %v930
    %v932 = vld [vmem:[%s8] sm:$0xf]
    %v933 = vld [vmem:[%s8 + $0x4] sm:$0xf]
    %v934 = vld [vmem:[%s8 + $0x8] sm:$0xf]
    %v935 = vld [vmem:[%s8 + $0xc] sm:$0xf]
    %v936 = vld [vmem:[%s8 + $0x10] sm:$0xf]
    %v937 = vld [vmem:[%s8 + $0x14] sm:$0xf]
    %v938 = vld [vmem:[%s8 + $0x18] sm:$0xf]
    %v939 = vld [vmem:[%s8 + $0x1c] sm:$0xf]
    %v940 = vld [vmem:[%s9] sm:$0x1]
    %v942 = vlaneseq
    %v943 = vshrl.u32 %v942, 7
    %v944 = vsub.s32 0, %v943
    %v945 = vrot.slane %v940, %v944
    %v955 = vunpack.c.l.b16 %v932
    %v956 = vunpack.c.l.b16 %v933
    %v957 = vunpack.c.l.b16 %v934
    %v958 = vunpack.c.l.b16 %v935
    %v959 = vunpack.c.l.b16 %v936
    %v960 = vunpack.c.l.b16 %v937
    %v961 = vunpack.c.l.b16 %v938
    %v962 = vunpack.c.l.b16 %v939
    %v963 = vpack.c.b16 %v956, %v955
    %v964 = vpack.c.b16 %v958, %v957
    %v965 = vpack.c.b16 %v960, %v959
    %v966 = vpack.c.b16 %v962, %v961
    %vm971 = vcmask 523264
    %v973 = vsel %vm971, %v931, 0
    %975 = vmatprep.subr.bf16.mxu0 0
    %976 = vmatpush1.bf16.msra.mxu0 %v963
    %977 = vmatprep.subr.bf16.mxu0 0
    %978 = vmatpush1.bf16.msra.mxu0 %v964
    %979 = vmatprep.subr.bf16.mxu0 0
    %980 = vmatpush1.bf16.msra.mxu0 %v965
    %981 = vmatprep.subr.bf16.mxu0 0
    %982 = vmatpush1.bf16.msra.mxu0 %v966
    %983 = vmatprep.subr.bf16.mxu0 0
    %984 = vmatpush1.bf16.msra.mxu0 0
    %985 = vmatprep.subr.bf16.mxu0 0
    %986 = vmatpush1.bf16.msra.mxu0 0
    %987 = vmatprep.subr.bf16.mxu0 0
    %988 = vmatpush1.bf16.msra.mxu0 0
    %989 = vmatprep.subr.bf16.mxu0 0
    %990 = vmatpush1.bf16.msra.mxu0 0
    %991 = vmatprep.subr.bf16.mxu0 0
    %992 = vmatpush1.bf16.msra.mxu0 0
    %993 = vmatprep.subr.bf16.mxu0 0
    %994 = vmatpush1.bf16.msra.mxu0 0
    %995 = vmatprep.subr.bf16.mxu0 0
    %996 = vmatpush1.bf16.msra.mxu0 0
    %997 = vmatprep.subr.bf16.mxu0 0
    %998 = vmatpush1.bf16.msra.mxu0 0
    %999 = vmatprep.subr.bf16.mxu0 0
    %1000 = vmatpush1.bf16.msra.mxu0 0
    %1001 = vmatprep.subr.bf16.mxu0 0
    %1002 = vmatpush1.bf16.msra.mxu0 0
    %1003 = vmatprep.subr.bf16.mxu0 0
    %1004 = vmatpush1.bf16.msra.mxu0 0
    %1005 = vmatprep.subr.bf16.mxu0 0
    %1006 = vmatpush1.bf16.msra.mxu0 0
    %1007 = vmatprep.mubr.bf16.mxu0 0
    %1008 = vmatmul.mubr.bf16.gmra.mrb[0].mxu0 %v973
    %v1009 = vpop.f32.mrb[0].mxu0
    %v1010 = vadd.f32 %v945, %v1009
    %v1011 = vpop.f32.mrb[0].mxu0
    %v1012 = vpop.f32.mrb[0].mxu0
    %v1013 = vpop.f32.mrb[0].mxu0
    %1014 = vdwg.mxu0
    %vm1015 = vcmask 89088
    %1016 = vst.msk [vmem:[#allocation5] sm:$0xff] %vm1015, %v1010
    // Predicated region
    $region46: #{tpu_custom_call.1} parent=1 // pred_check
      _
    $region47: #{tpu_custom_call.1} parent=1 // pred_check_branch
      %1018 = sbr.rel (0) target = $region49
    $region48: #{tpu_custom_call.1} parent=1 // pred_region
      %s1020 = ssub.s32 128, 128
      %1021 = vsyncadd [#allocation4], %s1020
      %s1023 = sshll.u32 [#allocation5], 4
      %s1024 = int_to_ptr.vmem [resolvable:$true] %s1023
      %1026 = dma.vmem_to_hbm [thread:$0]  %s1024, 128, %s10, [#allocation4]
    $region49: #{tpu_custom_call.1} parent=1 // pred_fallthru
      _
    // Predicated region
    $region50: #{tpu_custom_call.1} parent=1 // pred_check
      _
    $region51: #{tpu_custom_call.1} parent=1 // pred_check_branch
      %1028 = sbr.rel (0) target = $region53
    $region52: #{tpu_custom_call.1} parent=1 // pred_region
      %1029 = dma.done [#allocation4], 128
    $region53: #{tpu_custom_call.1} parent=1 // pred_fallthru
      _
    %1030 = vsyncpa [#allocation3], 1
    %1031 = vsyncpa [#allocation4], 1

</llo_original>
